<compile_context>
chip_gen: v5e
topology: v5e:2x2
jax: 0.10.0
libtpu: 0.0.40
codegen_flags: <defaults>
</compile_context>

<pallas_src>
import numpy as np
import jax
import jax.numpy as jnp
from jax.experimental import pallas as pl
from jax.experimental.pallas import tpu as pltpu

NOUT = 4             # 4 measured wires -> 4 probabilities per state
FIRST_BLOCK = 4      # layers applied before the first pair of measurements (spec)


# -----------------------------------------------------------------------------
# Host-side construction of the circuit tensors (float64, cast to f32 at the end).
# -----------------------------------------------------------------------------
def _rot(tx, ty, tz):
    cx, sx = np.cos(tx / 2), np.sin(tx / 2)
    cy, sy = np.cos(ty / 2), np.sin(ty / 2)
    RX = np.array([[cx, -1j * sx], [-1j * sx, cx]], dtype=np.complex128)
    RY = np.array([[cy, -sy], [sy, cy]], dtype=np.complex128)
    RZ = np.array([[np.exp(-1j * tz / 2), 0.0],
                   [0.0, np.exp(1j * tz / 2)]], dtype=np.complex128)
    return RZ @ RY @ RX                       # qml applies RX, then RY, then RZ


def _cnot_full(n, c, t):
    D = 2 ** n
    idx = np.arange(D)
    cbit = (idx >> (n - 1 - c)) & 1
    j = idx ^ (cbit << (n - 1 - t))
    M = np.zeros((D, D), dtype=np.complex128)
    M[j, idx] = 1.0
    return M


def _layer_unitary(n, layer_params):
    U = np.eye(1, dtype=np.complex128)
    for q in range(n):                        # wire 0 = most significant bit
        U = np.kron(U, _rot(*layer_params[q]))
    for j in range(n):                        # CNOT ring
        U = _cnot_full(n, j, (j + 1) % n) @ U
    return U


def _wire_mask(n, wire):
    idx = np.arange(2 ** n)
    return (((idx >> (n - 1 - wire)) & 1)).astype(np.float64)


def _pair_indicator(n, w0, b0, w1, b1):
    idx = np.arange(2 ** n)
    return ((((idx >> (n - 1 - w0)) & 1) == b0) &
            (((idx >> (n - 1 - w1)) & 1) == b1)).astype(np.float64)


def _real_embed_T(U):
    """Row-vector real embedding of psi_new = U psi: x_new = x @ M, x = [re | im]."""
    UrT, UiT = U.real.T, U.imag.T
    top = np.concatenate([UrT, UiT], axis=1)
    bot = np.concatenate([-UiT, UrT], axis=1)
    return np.concatenate([top, bot], axis=0)


def build_circuit_tensors(params_np, num_qubits, first_block=FIRST_BLOCK, pack=None):
    """params_np: (num_layers, num_qubits, 3) float64 -> (pack, dict of f32 tensors)."""
    num_layers = params_np.shape[0]
    assert num_layers >= first_block, "spec measures wires [0,1] after 4 layers"
    D = 2 ** num_qubits
    twoD = 2 * D

    Us = [_layer_unitary(num_qubits, params_np[l]) for l in range(num_layers)]
    UA = np.eye(D, dtype=np.complex128)
    for l in range(first_block):
        UA = Us[l] @ UA
    UB = np.eye(D, dtype=np.complex128)
    for l in range(first_block, num_layers):
        UB = Us[l] @ UB

    MA = _real_embed_T(UA)                    # (2D, 2D)
    MB = _real_embed_T(UB)                    # (2D, 2D)
    MA_top, MA_bot = MA[:D], MA[D:]           # re-rows / im-rows of stage A

    # Mid-circuit measurement of wires 0,1: dephase into the 4 computational branches
    # and fold each branch projector into its own copy of MB -> one (2D, 4*2D) matrix.
    MB_branch = np.zeros((twoD, 4 * twoD), dtype=np.float64)
    for m in range(4):
        ind = _pair_indicator(num_qubits, 0, (m >> 1) & 1, 1, m & 1)   # (D,)
        pm = np.concatenate([ind, ind])                                 # over [re | im]
        MB_branch[:, m * twoD:(m + 1) * twoD] = pm[:, None] * MB

    # Mask matrices: (x*x) @ mask gives P(wire == 1) since x*x = [re^2 | im^2].
    mask_first = np.zeros((twoD, NOUT), dtype=np.float64)
    for col, w in enumerate((0, 1)):
        mw = _wire_mask(num_qubits, w)
        mask_first[:, col] = np.concatenate([mw, mw])
    mask_sec_single = np.zeros((twoD, NOUT), dtype=np.float64)
    for col, w in enumerate((2, 3)):
        mw = _wire_mask(num_qubits, w)
        mask_sec_single[:, 2 + col] = np.concatenate([mw, mw])
    mask_second = np.tile(mask_sec_single, (4, 1))        # sum over the 4 branches

    # Lane packing: P states side by side per row so K/N of every dot is >= 128.
    if pack is None:
        pack = max(1, 128 // twoD)
    Ip = np.eye(pack)
    tensors = {
        "ma_top":      np.kron(Ip, MA_top),               # (P*D,   P*2D)
        "ma_bot":      np.kron(Ip, MA_bot),               # (P*D,   P*2D)
        "mb":          np.kron(Ip, MB_branch),            # (P*2D,  P*8D)
        "mask_first":  np.kron(Ip, mask_first),           # (P*2D,  P*4)
        "mask_second": np.kron(Ip, mask_second),          # (P*8D,  P*4)
    }
    return pack, {k: jnp.asarray(v, dtype=jnp.float32) for k, v in tensors.items()}


# -----------------------------------------------------------------------------
# Pallas kernel: 5 dots, state fully register-resident, compact output store.
# -----------------------------------------------------------------------------
def mcm_kernel(re_ref, im_ref, ma_top_ref, ma_bot_ref, mb_ref, m1_ref, m2_ref, out_ref):
    # stage A (layers 0..3):  xa = [re_new | im_new] per packed state
    xa = jnp.dot(re_ref[...], ma_top_ref[...], preferred_element_type=jnp.float32)
    xa = xa + jnp.dot(im_ref[...], ma_bot_ref[...], preferred_element_type=jnp.float32)
    # P(wire 0/1 == 1) after the first 4 layers
    p = jnp.dot(xa * xa, m1_ref[...], preferred_element_type=jnp.float32)
    # dephased stage B (projectors folded into mb): 4 branches per state, side by side
    xb = jnp.dot(xa, mb_ref[...], preferred_element_type=jnp.float32)
    # P(wire 2/3 == 1) after all layers, summed over branches
    p = p + jnp.dot(xb * xb, m2_ref[...], preferred_element_type=jnp.float32)
    out_ref[...] = p


def _pick_row_tile(rows, cap=512):
    """Batch tile (in packed rows). Prefer >= 2 grid steps so v7x's second TensorCore
    gets work ('parallel' semantics); keep tiles 8-aligned and capped for VMEM."""
    if rows < 16 or rows % 8:
        return rows                            # single tile (block == full dim is legal)
    t = min(cap, (rows // 2) // 8 * 8)
    while rows % t:
        t -= 8
    return t


def mcm_circuit_forward(psi_re, psi_im, pack, tensors):
    B, D = psi_re.shape
    assert B % pack == 0, "batch must be a multiple of the lane-packing factor"
    rows = B // pack
    re = psi_re.reshape(rows, pack * D)        # contiguous reshapes: no data movement
    im = psi_im.reshape(rows, pack * D)

    rt = _pick_row_tile(rows)
    grid = (rows // rt,)

    def batch_map(i):
        return (i, 0)

    def const_map(i):
        return (0, 0)

    out = pl.pallas_call(
        mcm_kernel,
        out_shape=jax.ShapeDtypeStruct((rows, pack * NOUT), jnp.float32),
        grid=grid,
        in_specs=[
            pl.BlockSpec((rt, pack * D), batch_map),
            pl.BlockSpec((rt, pack * D), batch_map),
            pl.BlockSpec(tensors["ma_top"].shape, const_map),
            pl.BlockSpec(tensors["ma_bot"].shape, const_map),
            pl.BlockSpec(tensors["mb"].shape, const_map),
            pl.BlockSpec(tensors["mask_first"].shape, const_map),
            pl.BlockSpec(tensors["mask_second"].shape, const_map),
        ],
        out_specs=pl.BlockSpec((rt, pack * NOUT), batch_map),
        compiler_params=pltpu.CompilerParams(
            dimension_semantics=("parallel",)),            # shards batch tiles on v7x
    )(re, im, tensors["ma_top"], tensors["ma_bot"], tensors["mb"],
      tensors["mask_first"], tensors["mask_second"])
    return out.reshape(B, NOUT)                            # contiguous reshape


# -----------------------------------------------------------------------------
# Exact float64 numpy reference (per-layer complex application + branch dephasing).
# -----------------------------------------------------------------------------
def reference_forward_np(psi_re, psi_im, params_np, num_qubits, first_block=FIRST_BLOCK):
    num_layers = params_np.shape[0]
    psi = psi_re.astype(np.float64) + 1j * psi_im.astype(np.float64)   # (B, D)
    Us = [_layer_unitary(num_qubits, params_np[l]) for l in range(num_layers)]
    for l in range(first_block):
        psi = psi @ Us[l].T
    p2 = np.abs(psi) ** 2
    p_first = np.stack([p2 @ _wire_mask(num_qubits, 0),
                        p2 @ _wire_mask(num_qubits, 1)], axis=1)
    # Mid-circuit measurement of wires 0,1: sum over the 4 collapsed branches.
    p_second = np.zeros((psi.shape[0], 2), dtype=np.float64)
    for m in range(4):
        ind = _pair_indicator(num_qubits, 0, (m >> 1) & 1, 1, m & 1)
        branch = psi * ind[None, :]
        for l in range(first_block, num_layers):
            branch = branch @ Us[l].T
        p2 = np.abs(branch) ** 2
        p_second[:, 0] += p2 @ _wire_mask(num_qubits, 2)
        p_second[:, 1] += p2 @ _wire_mask(num_qubits, 3)
    return np.concatenate([p_first, p_second], axis=1)


if __name__ == "__main__":
    num_qubits = 4
    num_layers = 6
    num_shots = 100          # unused: analytic marginal probabilities (see TODO above)
    batch = 64
    D = 2 ** num_qubits

    # Deterministic parameter init (torch.rand(num_qubits, 3) per layer -> U[0,1)).
    key = jax.random.PRNGKey(0)
    kp, kr, ki = jax.random.split(key, 3)
    params = jax.random.uniform(kp, (num_layers, num_qubits, 3), dtype=jnp.float32)
    params_np = np.asarray(params, dtype=np.float64)

    pack, tensors = build_circuit_tensors(params_np, num_qubits)

    # Deterministic input state (QubitStateVector), batched and normalized.
    sre = jax.random.normal(kr, (batch, D), dtype=jnp.float32)
    sim_ = jax.random.normal(ki, (batch, D), dtype=jnp.float32)
    norm = jnp.sqrt(jnp.sum(sre ** 2 + sim_ ** 2, axis=1, keepdims=True))
    sre = sre / norm
    sim_ = sim_ / norm

    probs = mcm_circuit_forward(sre, sim_, pack, tensors)
    probs = jax.block_until_ready(probs)

    ref = reference_forward_np(np.asarray(sre), np.asarray(sim_), params_np, num_qubits)
    assert probs.shape == (batch, 4)
    assert np.allclose(np.asarray(probs), ref, atol=5e-4), "mismatch vs reference"

    print("KERNEL_OK")
</pallas_src>

<mosaic_0001>
module attributes {stable_mosaic.version = 11 : i64} {
  func.func @mcm_kernel(%arg0: i32, %arg1: memref<8x64xf32, #tpu.memory_space<vmem>>, %arg2: memref<8x64xf32, #tpu.memory_space<vmem>>, %arg3: memref<64x128xf32, #tpu.memory_space<vmem>>, %arg4: memref<64x128xf32, #tpu.memory_space<vmem>>, %arg5: memref<128x512xf32, #tpu.memory_space<vmem>>, %arg6: memref<128x16xf32, #tpu.memory_space<vmem>>, %arg7: memref<512x16xf32, #tpu.memory_space<vmem>>, %arg8: memref<8x16xf32, #tpu.memory_space<vmem>>) attributes {dimension_semantics = [#tpu.dimension_semantics<parallel>], iteration_bounds = array<i64: 2>, scalar_prefetch = 0 : i64, scratch_operands = 0 : i64, tpu.core_type = #tpu.core_type<tc>, window_params = [{transform_indices = @transform_0, window_bounds = array<i64: 8, 64>}, {transform_indices = @transform_1, window_bounds = array<i64: 8, 64>}, {pipeline_mode = #tpu.pipeline_mode<synchronous>, transform_indices = @transform_2, window_bounds = array<i64: 64, 128>}, {pipeline_mode = #tpu.pipeline_mode<synchronous>, transform_indices = @transform_3, window_bounds = array<i64: 64, 128>}, {pipeline_mode = #tpu.pipeline_mode<synchronous>, transform_indices = @transform_4, window_bounds = array<i64: 128, 512>}, {pipeline_mode = #tpu.pipeline_mode<synchronous>, transform_indices = @transform_5, window_bounds = array<i64: 128, 16>}, {pipeline_mode = #tpu.pipeline_mode<synchronous>, transform_indices = @transform_6, window_bounds = array<i64: 512, 16>}, {transform_indices = @transform_7, window_bounds = array<i64: 8, 16>}]} {
    %c0 = arith.constant 0 : index
    %c0_0 = arith.constant 0 : index
    %0 = vector.load %arg1[%c0, %c0_0] : memref<8x64xf32, #tpu.memory_space<vmem>>, vector<8x64xf32>
    %c0_1 = arith.constant 0 : index
    %c0_2 = arith.constant 0 : index
    %1 = vector.load %arg3[%c0_1, %c0_2] : memref<64x128xf32, #tpu.memory_space<vmem>>, vector<64x128xf32>
    %cst = arith.constant dense<0.000000e+00> : vector<8x128xf32>
    %2 = tpu.matmul %0, %1, %cst {dimension_numbers = #tpu.dot_dimension_numbers<[1], [0], [0], [1], [0, 0, 1, 1], [], []>} : vector<8x64xf32>, vector<64x128xf32>, vector<8x128xf32> -> vector<8x128xf32>
    %c0_3 = arith.constant 0 : index
    %c0_4 = arith.constant 0 : index
    %3 = vector.load %arg2[%c0_3, %c0_4] : memref<8x64xf32, #tpu.memory_space<vmem>>, vector<8x64xf32>
    %c0_5 = arith.constant 0 : index
    %c0_6 = arith.constant 0 : index
    %4 = vector.load %arg4[%c0_5, %c0_6] : memref<64x128xf32, #tpu.memory_space<vmem>>, vector<64x128xf32>
    %cst_7 = arith.constant dense<0.000000e+00> : vector<8x128xf32>
    %5 = tpu.matmul %3, %4, %cst_7 {dimension_numbers = #tpu.dot_dimension_numbers<[1], [0], [0], [1], [0, 0, 1, 1], [], []>} : vector<8x64xf32>, vector<64x128xf32>, vector<8x128xf32> -> vector<8x128xf32>
    %6 = arith.addf %2, %5 : vector<8x128xf32>
    %7 = arith.mulf %6, %6 : vector<8x128xf32>
    %c0_8 = arith.constant 0 : index
    %c0_9 = arith.constant 0 : index
    %8 = vector.load %arg6[%c0_8, %c0_9] : memref<128x16xf32, #tpu.memory_space<vmem>>, vector<128x16xf32>
    %cst_10 = arith.constant dense<0.000000e+00> : vector<8x16xf32>
    %9 = tpu.matmul %7, %8, %cst_10 {dimension_numbers = #tpu.dot_dimension_numbers<[1], [0], [0], [1], [0, 0, 1, 1], [], []>} : vector<8x128xf32>, vector<128x16xf32>, vector<8x16xf32> -> vector<8x16xf32>
    %c0_11 = arith.constant 0 : index
    %c0_12 = arith.constant 0 : index
    %10 = vector.load %arg5[%c0_11, %c0_12] : memref<128x512xf32, #tpu.memory_space<vmem>>, vector<128x512xf32>
    %cst_13 = arith.constant dense<0.000000e+00> : vector<8x512xf32>
    %11 = tpu.matmul %6, %10, %cst_13 {dimension_numbers = #tpu.dot_dimension_numbers<[1], [0], [0], [1], [0, 0, 1, 1], [], []>} : vector<8x128xf32>, vector<128x512xf32>, vector<8x512xf32> -> vector<8x512xf32>
    %12 = arith.mulf %11, %11 : vector<8x512xf32>
    %c0_14 = arith.constant 0 : index
    %c0_15 = arith.constant 0 : index
    %13 = vector.load %arg7[%c0_14, %c0_15] : memref<512x16xf32, #tpu.memory_space<vmem>>, vector<512x16xf32>
    %cst_16 = arith.constant dense<0.000000e+00> : vector<8x16xf32>
    %14 = tpu.matmul %12, %13, %cst_16 {dimension_numbers = #tpu.dot_dimension_numbers<[1], [0], [0], [1], [0, 0, 1, 1], [], []>} : vector<8x512xf32>, vector<512x16xf32>, vector<8x16xf32> -> vector<8x16xf32>
    %15 = arith.addf %9, %14 : vector<8x16xf32>
    %c0_17 = arith.constant 0 : index
    %c0_18 = arith.constant 0 : index
    %16 = vector.load %arg8[%c0_17, %c0_18] : memref<8x16xf32, #tpu.memory_space<vmem>>, vector<8x16xf32>
    tpu.vector_store %arg8[%c0_17, %c0_18], %15 {strides = array<i32>} : memref<8x16xf32, #tpu.memory_space<vmem>>, vector<8x16xf32>,
    return
  }
  func.func @transform_0(%arg0: i32) -> (i32, i32) {
    %c0_i32 = arith.constant 0 : i32
    %c0_i32_0 = arith.constant 0 : i32
    return %arg0, %c0_i32 : i32, i32
  }
  func.func @transform_1(%arg0: i32) -> (i32, i32) {
    %c0_i32 = arith.constant 0 : i32
    %c0_i32_0 = arith.constant 0 : i32
    return %arg0, %c0_i32 : i32, i32
  }
  func.func @transform_2(%arg0: i32) -> (i32, i32) {
    %c0_i32 = arith.constant 0 : i32
    %c0_i32_0 = arith.constant 0 : i32
    %c0_i32_1 = arith.constant 0 : i32
    return %c0_i32, %c0_i32_0 : i32, i32
  }
  func.func @transform_3(%arg0: i32) -> (i32, i32) {
    %c0_i32 = arith.constant 0 : i32
    %c0_i32_0 = arith.constant 0 : i32
    %c0_i32_1 = arith.constant 0 : i32
    return %c0_i32, %c0_i32_0 : i32, i32
  }
  func.func @transform_4(%arg0: i32) -> (i32, i32) {
    %c0_i32 = arith.constant 0 : i32
    %c0_i32_0 = arith.constant 0 : i32
    %c0_i32_1 = arith.constant 0 : i32
    return %c0_i32, %c0_i32_0 : i32, i32
  }
  func.func @transform_5(%arg0: i32) -> (i32, i32) {
    %c0_i32 = arith.constant 0 : i32
    %c0_i32_0 = arith.constant 0 : i32
    %c0_i32_1 = arith.constant 0 : i32
    return %c0_i32, %c0_i32_0 : i32, i32
  }
  func.func @transform_6(%arg0: i32) -> (i32, i32) {
    %c0_i32 = arith.constant 0 : i32
    %c0_i32_0 = arith.constant 0 : i32
    %c0_i32_1 = arith.constant 0 : i32
    return %c0_i32, %c0_i32_0 : i32, i32
  }
  func.func @transform_7(%arg0: i32) -> (i32, i32) {
    %c0_i32 = arith.constant 0 : i32
    %c0_i32_0 = arith.constant 0 : i32
    return %arg0, %c0_i32 : i32, i32
  }
}

</mosaic_0001>

<llo_original>
// kernel: tpu_custom_call.1
$region0: #{tpu_custom_call.1}
  #allocation0 [shape = 'u32[]', space=smem, size = 0x4, offset = 0x4, fixed_abs, tag = 'smem constant byte address 0x4 - core index']
  #allocation1 [shape = 'u32[72,128]{1,0:T(1,128)}', space=vmem, size = 0x9000, scoped, tag = 'internal scratch']
  %s0 = inlined_call_operand.vmem [shape: f32[16,64], index: 0, kind: input, shape index: {}]
  %s1 = inlined_call_operand.hbm [shape: f32[16,64], index: 1, kind: input, shape index: {}]
  %s2 = inlined_call_operand.vmem [shape: f32[64,128], index: 2, kind: input, shape index: {}]
  %s3 = inlined_call_operand.vmem [shape: f32[64,128], index: 3, kind: input, shape index: {}]
  %s4 = inlined_call_operand.vmem [shape: f32[128,512], index: 4, kind: input, shape index: {}]
  %s5 = inlined_call_operand.vmem [shape: f32[128,16], index: 5, kind: input, shape index: {}]
  %s6 = inlined_call_operand.vmem [shape: f32[512,16], index: 6, kind: input, shape index: {}]
  %s7 = inlined_call_operand.hbm [shape: f32[16,16], index: 7, kind: output, shape index: {}]
  %s8 = sld [smem:[#allocation0]]
  $region65: #{tpu_custom_call.1} parent=0
    _
  %s10 = ssub.s32 1, %s8
  %s11 = scalar_select 0, %s10, %s8
  $region1: #{tpu_custom_call.1} parent=0
    #allocation2 [shape = 'u8[8192]{0}', space=vmem, size = 0x2000, scoped, tag = 'input window, operand 1']
    #allocation3 [shape = 's32[2]{0}', space=sflag, size = 0x8, scoped, tag = 'scoped memory for tpu_custom_call.1']
    #allocation4 [shape = 's32[2]{0}', space=sflag, size = 0x8, scoped, tag = 'scoped memory for tpu_custom_call.1']
    #allocation5 [shape = 'u8[8192]{0}', space=vmem, size = 0x2000, scoped, tag = 'output window, operand 0']
    %12 = vsyncpa [#allocation3], 0
    %s13 = scalar_lea.sflag [#allocation3], 1
    %14 = vsyncpa %s13, 0
    %15 = vsyncpa [#allocation4], 0
    %s16 = scalar_lea.sflag [#allocation4], 1
    %17 = vsyncpa %s16, 0
    loop: start=0, step=1, limit=4
    $region2: #{tpu_custom_call.1} parent=1 // loop_pre_header
      _
    $region3: #{tpu_custom_call.1} parent=1 // loop_header
      %s19 = sphi 0, %s23
      %p20 = scmp.ge.s32.totalorder %s19, 4
      %s29 = sphi 0, %s31
      %s32 = sphi 0, %s29
      %s33 = sphi 0, %s32
      %s49 = sphi 0, %s33
      %s55 = sphi 0, %s57
      %s58 = sphi 0, %s55
      %s59 = sphi 0, %s58
      %s75 = sphi 0, %s59
      %s79 = sphi 0, %s79
      %s81 = sphi 0, %s79
      %s82 = sphi 0, %s81
      %s96 = sphi 0, %s82
      %s100 = sphi 0, %s100
      %s102 = sphi 0, %s100
      %s103 = sphi 0, %s102
      %s117 = sphi 0, %s103
      %s121 = sphi 0, %s121
      %s123 = sphi 0, %s121
      %s124 = sphi 0, %s123
      %s138 = sphi 0, %s124
      %s142 = sphi 0, %s142
      %s144 = sphi 0, %s142
      %s145 = sphi 0, %s144
      %s159 = sphi 0, %s145
      %s163 = sphi 0, %s163
      %s165 = sphi 0, %s163
      %s166 = sphi 0, %s165
      %s180 = sphi 0, %s166
      %s186 = sphi 0, %s188
      %s189 = sphi 0, %s186
      %s190 = sphi 0, %s189
      %s206 = sphi 0, %s190
    $region4: #{tpu_custom_call.1} parent=1 // loop_header_branch
      %22 = sbr.rel (%p20) target = $region8
    $region5: #{tpu_custom_call.1} parent=1 // loop_body
      %s24 = ssub.s32 %s19, 1
      %s25 = ssub.s32 %s19, 2
      %s26 = sadd.s32 %s19, 1
      %s27 = ssub.s32 %s19, %s26
      %p28 = scmp.eq.s32.totalorder %s27, 0
      %s30 = sadd.s32 %s29, 1
      %s31 = scalar_select %p28, %s29, %s30
      %p34 = pneg %p28
      %p35 = scmp.eq.s32.totalorder %s19, 1
      %p36 = por %p34, %p35
      %p37 = scmp.ne.s32.totalorder %s29, %s32
      %p38 = scmp.eq.s32.totalorder %s19, 0
      %p39 = por %p37, %p38
      %p40 = scmp.ne.s32.totalorder %s29, %s32
      %p41 = scmp.eq.s32.totalorder %s24, 1
      %p42 = por %p40, %p41
      %p43 = scmp.ne.s32.totalorder %s32, %s33
      %p44 = scmp.eq.s32.totalorder %s24, 0
      %p45 = por %p43, %p44
      %p46 = scmp.ne.s32.totalorder %s32, %s33
      %p47 = scmp.eq.s32.totalorder %s25, 1
      %p48 = por %p46, %p47
      %p50 = scmp.ne.s32.totalorder %s33, %s49
      %p51 = scmp.eq.s32.totalorder %s25, 0
      %p52 = por %p50, %p51
      %s53 = ssub.s32 %s19, %s26
      %p54 = scmp.eq.s32.totalorder %s53, 0
      %s56 = sadd.s32 %s55, 1
      %s57 = scalar_select %p54, %s55, %s56
      %p60 = pneg %p54
      %p61 = scmp.eq.s32.totalorder %s19, 1
      %p62 = por %p60, %p61
      %p63 = scmp.ne.s32.totalorder %s55, %s58
      %p64 = scmp.eq.s32.totalorder %s19, 0
      %p65 = por %p63, %p64
      %p66 = scmp.ne.s32.totalorder %s55, %s58
      %p67 = scmp.eq.s32.totalorder %s24, 1
      %p68 = por %p66, %p67
      %p69 = scmp.ne.s32.totalorder %s58, %s59
      %p70 = scmp.eq.s32.totalorder %s24, 0
      %p71 = por %p69, %p70
      %p72 = scmp.ne.s32.totalorder %s58, %s59
      %p73 = scmp.eq.s32.totalorder %s25, 1
      %p74 = por %p72, %p73
      %p76 = scmp.ne.s32.totalorder %s59, %s75
      %p77 = scmp.eq.s32.totalorder %s25, 0
      %p78 = por %p76, %p77
      %s80 = sadd.s32 %s79, 1
      %p83 = scmp.eq.s32.totalorder %s19, 1
      %p84 = scmp.ne.s32.totalorder %s79, %s81
      %p85 = scmp.eq.s32.totalorder %s19, 0
      %p86 = por %p84, %p85
      %p87 = scmp.ne.s32.totalorder %s79, %s81
      %p88 = scmp.eq.s32.totalorder %s24, 1
      %p89 = por %p87, %p88
      %p90 = scmp.ne.s32.totalorder %s81, %s82
      %p91 = scmp.eq.s32.totalorder %s24, 0
      %p92 = por %p90, %p91
      %p93 = scmp.ne.s32.totalorder %s81, %s82
      %p94 = scmp.eq.s32.totalorder %s25, 1
      %p95 = por %p93, %p94
      %p97 = scmp.ne.s32.totalorder %s82, %s96
      %p98 = scmp.eq.s32.totalorder %s25, 0
      %p99 = por %p97, %p98
      %s101 = sadd.s32 %s100, 1
      %p104 = scmp.eq.s32.totalorder %s19, 1
      %p105 = scmp.ne.s32.totalorder %s100, %s102
      %p106 = scmp.eq.s32.totalorder %s19, 0
      %p107 = por %p105, %p106
      %p108 = scmp.ne.s32.totalorder %s100, %s102
      %p109 = scmp.eq.s32.totalorder %s24, 1
      %p110 = por %p108, %p109
      %p111 = scmp.ne.s32.totalorder %s102, %s103
      %p112 = scmp.eq.s32.totalorder %s24, 0
      %p113 = por %p111, %p112
      %p114 = scmp.ne.s32.totalorder %s102, %s103
      %p115 = scmp.eq.s32.totalorder %s25, 1
      %p116 = por %p114, %p115
      %p118 = scmp.ne.s32.totalorder %s103, %s117
      %p119 = scmp.eq.s32.totalorder %s25, 0
      %p120 = por %p118, %p119
      %s122 = sadd.s32 %s121, 1
      %p125 = scmp.eq.s32.totalorder %s19, 1
      %p126 = scmp.ne.s32.totalorder %s121, %s123
      %p127 = scmp.eq.s32.totalorder %s19, 0
      %p128 = por %p126, %p127
      %p129 = scmp.ne.s32.totalorder %s121, %s123
      %p130 = scmp.eq.s32.totalorder %s24, 1
      %p131 = por %p129, %p130
      %p132 = scmp.ne.s32.totalorder %s123, %s124
      %p133 = scmp.eq.s32.totalorder %s24, 0
      %p134 = por %p132, %p133
      %p135 = scmp.ne.s32.totalorder %s123, %s124
      %p136 = scmp.eq.s32.totalorder %s25, 1
      %p137 = por %p135, %p136
      %p139 = scmp.ne.s32.totalorder %s124, %s138
      %p140 = scmp.eq.s32.totalorder %s25, 0
      %p141 = por %p139, %p140
      %s143 = sadd.s32 %s142, 1
      %p146 = scmp.eq.s32.totalorder %s19, 1
      %p147 = scmp.ne.s32.totalorder %s142, %s144
      %p148 = scmp.eq.s32.totalorder %s19, 0
      %p149 = por %p147, %p148
      %p150 = scmp.ne.s32.totalorder %s142, %s144
      %p151 = scmp.eq.s32.totalorder %s24, 1
      %p152 = por %p150, %p151
      %p153 = scmp.ne.s32.totalorder %s144, %s145
      %p154 = scmp.eq.s32.totalorder %s24, 0
      %p155 = por %p153, %p154
      %p156 = scmp.ne.s32.totalorder %s144, %s145
      %p157 = scmp.eq.s32.totalorder %s25, 1
      %p158 = por %p156, %p157
      %p160 = scmp.ne.s32.totalorder %s145, %s159
      %p161 = scmp.eq.s32.totalorder %s25, 0
      %p162 = por %p160, %p161
      %s164 = sadd.s32 %s163, 1
      %p167 = scmp.eq.s32.totalorder %s19, 1
      %p168 = scmp.ne.s32.totalorder %s163, %s165
      %p169 = scmp.eq.s32.totalorder %s19, 0
      %p170 = por %p168, %p169
      %p171 = scmp.ne.s32.totalorder %s163, %s165
      %p172 = scmp.eq.s32.totalorder %s24, 1
      %p173 = por %p171, %p172
      %p174 = scmp.ne.s32.totalorder %s165, %s166
      %p175 = scmp.eq.s32.totalorder %s24, 0
      %p176 = por %p174, %p175
      %p177 = scmp.ne.s32.totalorder %s165, %s166
      %p178 = scmp.eq.s32.totalorder %s25, 1
      %p179 = por %p177, %p178
      %p181 = scmp.ne.s32.totalorder %s166, %s180
      %p182 = scmp.eq.s32.totalorder %s25, 0
      %p183 = por %p181, %p182
      %s184 = ssub.s32 %s19, %s26
      %p185 = scmp.eq.s32.totalorder %s184, 0
      %s187 = sadd.s32 %s186, 1
      %s188 = scalar_select %p185, %s186, %s187
      %p191 = pneg %p185
      %p192 = scmp.eq.s32.totalorder %s19, 1
      %p193 = por %p191, %p192
      %p194 = scmp.ne.s32.totalorder %s186, %s189
      %p195 = scmp.eq.s32.totalorder %s19, 0
      %p196 = por %p194, %p195
      %p197 = scmp.ne.s32.totalorder %s186, %s189
      %p198 = scmp.eq.s32.totalorder %s24, 1
      %p199 = por %p197, %p198
      %p200 = scmp.ne.s32.totalorder %s189, %s190
      %p201 = scmp.eq.s32.totalorder %s24, 0
      %p202 = por %p200, %p201
      %p203 = scmp.ne.s32.totalorder %s189, %s190
      %p204 = scmp.eq.s32.totalorder %s25, 1
      %p205 = por %p203, %p204
      %p207 = scmp.ne.s32.totalorder %s190, %s206
      %p208 = scmp.eq.s32.totalorder %s25, 0
      %p209 = por %p207, %p208
      %p210 = scmp.le.s32.totalorder 1, %s19
      %p211 = scmp.lt.s32.totalorder %s19, 3
      %p212 = pnand %p210, %p211
      %p213 = pneg %p212
      // Predicated region
      $region9: #{tpu_custom_call.1} parent=5 // pred_check
        _
      $region10: #{tpu_custom_call.1} parent=5 // pred_check_branch
        %215 = sbr.rel (%p212) target = $region12
      $region11: #{tpu_custom_call.1} parent=5 // pred_region
        %s216 = ssub.s32 %s19, 1
        // Predicated region
        $region13: #{tpu_custom_call.1} parent=11 // pred_check
          %p217 = pneg %p92
        $region14: #{tpu_custom_call.1} parent=11 // pred_check_branch
          %219 = sbr.rel (%p217) target = $region16
        $region15: #{tpu_custom_call.1} parent=11 // pred_region
          _
        $region16: #{tpu_custom_call.1} parent=11 // pred_fallthru
          _
        // Predicated region
        $region17: #{tpu_custom_call.1} parent=11 // pred_check
          %p220 = pneg %p113
        $region18: #{tpu_custom_call.1} parent=11 // pred_check_branch
          %222 = sbr.rel (%p220) target = $region20
        $region19: #{tpu_custom_call.1} parent=11 // pred_region
          _
        $region20: #{tpu_custom_call.1} parent=11 // pred_fallthru
          _
        // Predicated region
        $region21: #{tpu_custom_call.1} parent=11 // pred_check
          %p223 = pneg %p134
        $region22: #{tpu_custom_call.1} parent=11 // pred_check_branch
          %225 = sbr.rel (%p223) target = $region24
        $region23: #{tpu_custom_call.1} parent=11 // pred_region
          _
        $region24: #{tpu_custom_call.1} parent=11 // pred_fallthru
          _
        // Predicated region
        $region25: #{tpu_custom_call.1} parent=11 // pred_check
          %p226 = pneg %p155
        $region26: #{tpu_custom_call.1} parent=11 // pred_check_branch
          %228 = sbr.rel (%p226) target = $region28
        $region27: #{tpu_custom_call.1} parent=11 // pred_region
          _
        $region28: #{tpu_custom_call.1} parent=11 // pred_fallthru
          _
        // Predicated region
        $region29: #{tpu_custom_call.1} parent=11 // pred_check
          %p229 = pneg %p176
        $region30: #{tpu_custom_call.1} parent=11 // pred_check_branch
          %231 = sbr.rel (%p229) target = $region32
        $region31: #{tpu_custom_call.1} parent=11 // pred_region
          _
        $region32: #{tpu_custom_call.1} parent=11 // pred_fallthru
          _
      $region12: #{tpu_custom_call.1} parent=5 // pred_fallthru
        _
      %p232 = scmp.lt.s32.totalorder %s19, 2
      // Predicated region
      $region33: #{tpu_custom_call.1} parent=5 // pred_check
        %p233 = pneg %p232
      $region34: #{tpu_custom_call.1} parent=5 // pred_check_branch
        %235 = sbr.rel (%p233) target = $region36
      $region35: #{tpu_custom_call.1} parent=5 // pred_region
        // Predicated region
        $region37: #{tpu_custom_call.1} parent=35 // pred_check
          %p236 = pneg %p39
        $region38: #{tpu_custom_call.1} parent=35 // pred_check_branch
          %238 = sbr.rel (%p236) target = $region40
        $region39: #{tpu_custom_call.1} parent=35 // pred_region
          %p239 = scmp.lt.s32.totalorder %s19, 1
          %s240 = scalar_select %p239, %s19, 1
          %s241 = smul.addr %s240, 8
          %s242 = scalar_lea.vmem %s0, %s241
        $region40: #{tpu_custom_call.1} parent=35 // pred_fallthru
          _
        // Predicated region
        $region41: #{tpu_custom_call.1} parent=35 // pred_check
          %p243 = pneg %p65
        $region42: #{tpu_custom_call.1} parent=35 // pred_check_branch
          %245 = sbr.rel (%p243) target = $region44
        $region43: #{tpu_custom_call.1} parent=35 // pred_region
          %s246 = sand.u32 %s55, 1
          %s247 = scalar_lea.sflag [#allocation3], %s246
          %s248 = sand.u32 %s55, 1
          %s249 = smul.addr %s248, 8
          %s250 = scalar_lea.vmem [#allocation2], %s249
          %252 = vsyncadd %s247, 0
          %s253 = smul.addr %s19, 8
          %s254 = scalar_lea.hbm %s1, %s253
          %s256 = sshll.u32 %s254, 4
          %s257 = int_to_ptr.hbm [resolvable:$true] %s256
          %s258 = sshll.u32 %s250, 4
          %s259 = int_to_ptr.vmem [resolvable:$true] %s258
          %261 = dma.hbm_to_vmem [thread:$0]  %s257, 128, %s259, %s247
        $region44: #{tpu_custom_call.1} parent=35 // pred_fallthru
          _
      $region36: #{tpu_custom_call.1} parent=5 // pred_fallthru
        _
      %p262 = scmp.le.s32.totalorder 1, %s19
      %p263 = scmp.lt.s32.totalorder %s19, 3
      %p264 = pnand %p262, %p263
      %p265 = pneg %p264
      // Predicated region
      $region45: #{tpu_custom_call.1} parent=5 // pred_check
        _
      $region46: #{tpu_custom_call.1} parent=5 // pred_check_branch
        %267 = sbr.rel (%p264) target = $region48
      $region47: #{tpu_custom_call.1} parent=5 // pred_region
        %s268 = ssub.s32 %s19, 1
        %s269 = sand.u32 %s58, 1
        %s270 = scalar_lea.sflag [#allocation3], %s269
        %s271 = sand.u32 %s58, 1
        %s272 = smul.addr %s271, 8
        %s273 = scalar_lea.vmem [#allocation2], %s272
        // Predicated region
        $region49: #{tpu_custom_call.1} parent=47 // pred_check
          %p274 = pneg %p71
        $region50: #{tpu_custom_call.1} parent=47 // pred_check_branch
          %276 = sbr.rel (%p274) target = $region52
        $region51: #{tpu_custom_call.1} parent=47 // pred_region
          %278 = dma.done %s270, 128
        $region52: #{tpu_custom_call.1} parent=47 // pred_fallthru
          _
        %p279 = scmp.lt.s32.totalorder %s24, 1
        %s280 = scalar_select %p279, %s24, 1
        %s281 = smul.addr %s280, 8
        %s282 = scalar_lea.vmem %s0, %s281
        %p283 = pneg %p45
        %p284 = pneg %p42
        %s285 = sand.u32 %s58, 1
        %s286 = scalar_lea.sflag [#allocation3], %s285
        %s287 = sand.u32 %s58, 1
        %s288 = smul.addr %s287, 8
        %s289 = scalar_lea.vmem [#allocation2], %s288
        %p290 = pneg %p71
        %p291 = pneg %p68
        %p292 = pneg %p92
        %p293 = pneg %p89
        %p294 = pneg %p113
        %p295 = pneg %p110
        %p296 = pneg %p134
        %p297 = pneg %p131
        %p298 = pneg %p155
        %p299 = pneg %p152
        %p300 = pneg %p176
        %p301 = pneg %p173
        %p302 = pneg %p202
        %p303 = pneg %p199
        %s304 = sand.u32 %s189, 1
        %s305 = scalar_lea.sflag [#allocation4], %s304
        %s306 = sand.u32 %s189, 1
        %s307 = smul.addr %s306, 8
        %s308 = scalar_lea.vmem [#allocation5], %s307
        %p309 = scmp.lt.s32.totalorder %s24, 1
        %s310 = scalar_select %p309, %s24, 1
        %s311 = smul.addr %s310, 8
        %s312 = scalar_lea.vmem %s0, %s311
        %v313 = vld [vmem:[%s312] sm:$0xff]
        %v314 = vld [vmem:[%s2] sm:$0xff]
        %v315 = vld [vmem:[%s2 + $0x8] sm:$0xff]
        %v316 = vld [vmem:[%s2 + $0x10] sm:$0xff]
        %v317 = vld [vmem:[%s2 + $0x18] sm:$0xff]
        %v318 = vld [vmem:[%s2 + $0x20] sm:$0xff]
        %v319 = vld [vmem:[%s2 + $0x28] sm:$0xff]
        %v320 = vld [vmem:[%s2 + $0x30] sm:$0xff]
        %v321 = vld [vmem:[%s2 + $0x38] sm:$0xff]
        %v322 = vld [vmem:[%s273] sm:$0xff]
        %v323 = vld [vmem:[%s3] sm:$0xff]
        %v324 = vld [vmem:[%s3 + $0x8] sm:$0xff]
        %v325 = vld [vmem:[%s3 + $0x10] sm:$0xff]
        %v326 = vld [vmem:[%s3 + $0x18] sm:$0xff]
        %v327 = vld [vmem:[%s3 + $0x20] sm:$0xff]
        %v328 = vld [vmem:[%s3 + $0x28] sm:$0xff]
        %v329 = vld [vmem:[%s3 + $0x30] sm:$0xff]
        %v330 = vld [vmem:[%s3 + $0x38] sm:$0xff]
        %vm331 = vcmask 523264
        %v333 = vsel %vm331, %v322, 0
        %335 = vmatpush.msra.mxu0 0.0
        %336 = vmatpush.msra.mxu0 0.0
        %337 = vmatpush.msra.mxu0 0.0
        %338 = vmatpush.msra.mxu0 0.0
        %339 = vmatpush.msra.mxu0 0.0
        %340 = vmatpush.msra.mxu0 0.0
        %341 = vmatpush.msra.mxu0 0.0
        %342 = vmatpush.msra.mxu0 0.0
        %343 = vmatpush.msra.mxu0 %v330
        %344 = vmatpush.msra.mxu0 %v329
        %345 = vmatpush.msra.mxu0 %v328
        %346 = vmatpush.msra.mxu0 %v327
        %347 = vmatpush.msra.mxu0 %v326
        %348 = vmatpush.msra.mxu0 %v325
        %349 = vmatpush.msra.mxu0 %v324
        %350 = vmatpush.msra.mxu0 %v323
        %351 = vmatmul.f32.gmra.mxu0 %v333
        %v352 = vpop.f32.mrf.mxu0
        %v353 = vadd.f32 0.0, %v352
        %354 = vdwg.mxu0
        %v356 = vsel %vm331, %v313, 0
        %358 = vmatpush.msra.mxu0 0.0
        %359 = vmatpush.msra.mxu0 0.0
        %360 = vmatpush.msra.mxu0 0.0
        %361 = vmatpush.msra.mxu0 0.0
        %362 = vmatpush.msra.mxu0 0.0
        %363 = vmatpush.msra.mxu0 0.0
        %364 = vmatpush.msra.mxu0 0.0
        %365 = vmatpush.msra.mxu0 0.0
        %366 = vmatpush.msra.mxu0 %v321
        %367 = vmatpush.msra.mxu0 %v320
        %368 = vmatpush.msra.mxu0 %v319
        %369 = vmatpush.msra.mxu0 %v318
        %370 = vmatpush.msra.mxu0 %v317
        %371 = vmatpush.msra.mxu0 %v316
        %372 = vmatpush.msra.mxu0 %v315
        %373 = vmatpush.msra.mxu0 %v314
        %374 = vmatmul.f32.gmra.mxu0 %v356
        %v375 = vpop.f32.mrf.mxu0
        %v376 = vadd.f32 %v353, %v375
        %377 = vdwg.mxu0
        %v378 = vmul.f32 %v376, %v376
        %v379 = vld [vmem:[%s5] sm:$0xff]
        %v380 = vld [vmem:[%s5 + $0x8] sm:$0xff]
        %v381 = vld [vmem:[%s5 + $0x10] sm:$0xff]
        %v382 = vld [vmem:[%s5 + $0x18] sm:$0xff]
        %v383 = vld [vmem:[%s5 + $0x20] sm:$0xff]
        %v384 = vld [vmem:[%s5 + $0x28] sm:$0xff]
        %v385 = vld [vmem:[%s5 + $0x30] sm:$0xff]
        %v386 = vld [vmem:[%s5 + $0x38] sm:$0xff]
        %v387 = vld [vmem:[%s5 + $0x40] sm:$0xff]
        %v388 = vld [vmem:[%s5 + $0x48] sm:$0xff]
        %v389 = vld [vmem:[%s5 + $0x50] sm:$0xff]
        %v390 = vld [vmem:[%s5 + $0x58] sm:$0xff]
        %v391 = vld [vmem:[%s5 + $0x60] sm:$0xff]
        %v392 = vld [vmem:[%s5 + $0x68] sm:$0xff]
        %v393 = vld [vmem:[%s5 + $0x70] sm:$0xff]
        %v394 = vld [vmem:[%s5 + $0x78] sm:$0xff]
        %v395 = vld [vmem:[%s4] sm:$0xff]
        %v396 = vld [vmem:[%s4 + $0x8] sm:$0xff]
        %v397 = vld [vmem:[%s4 + $0x10] sm:$0xff]
        %v398 = vld [vmem:[%s4 + $0x18] sm:$0xff]
        %v399 = vld [vmem:[%s4 + $0x20] sm:$0xff]
        %v400 = vld [vmem:[%s4 + $0x28] sm:$0xff]
        %v401 = vld [vmem:[%s4 + $0x30] sm:$0xff]
        %v402 = vld [vmem:[%s4 + $0x38] sm:$0xff]
        %v403 = vld [vmem:[%s4 + $0x40] sm:$0xff]
        %v404 = vld [vmem:[%s4 + $0x48] sm:$0xff]
        %v405 = vld [vmem:[%s4 + $0x50] sm:$0xff]
        %v406 = vld [vmem:[%s4 + $0x58] sm:$0xff]
        %v407 = vld [vmem:[%s4 + $0x60] sm:$0xff]
        %v408 = vld [vmem:[%s4 + $0x68] sm:$0xff]
        %v409 = vld [vmem:[%s4 + $0x70] sm:$0xff]
        %v410 = vld [vmem:[%s4 + $0x78] sm:$0xff]
        %v411 = vld [vmem:[%s4 + $0x80] sm:$0xff]
        %v412 = vld [vmem:[%s4 + $0x88] sm:$0xff]
        %v413 = vld [vmem:[%s4 + $0x90] sm:$0xff]
        %v414 = vld [vmem:[%s4 + $0x98] sm:$0xff]
        %v415 = vld [vmem:[%s4 + $0xa0] sm:$0xff]
        %v416 = vld [vmem:[%s4 + $0xa8] sm:$0xff]
        %v417 = vld [vmem:[%s4 + $0xb0] sm:$0xff]
        %v418 = vld [vmem:[%s4 + $0xb8] sm:$0xff]
        %v419 = vld [vmem:[%s4 + $0xc0] sm:$0xff]
        %v420 = vld [vmem:[%s4 + $0xc8] sm:$0xff]
        %v421 = vld [vmem:[%s4 + $0xd0] sm:$0xff]
        %v422 = vld [vmem:[%s4 + $0xd8] sm:$0xff]
        %v423 = vld [vmem:[%s4 + $0xe0] sm:$0xff]
        %v424 = vld [vmem:[%s4 + $0xe8] sm:$0xff]
        %v425 = vld [vmem:[%s4 + $0xf0] sm:$0xff]
        %v426 = vld [vmem:[%s4 + $0xf8] sm:$0xff]
        %v427 = vld [vmem:[%s4 + $0x100] sm:$0xff]
        %v428 = vld [vmem:[%s4 + $0x108] sm:$0xff]
        %v429 = vld [vmem:[%s4 + $0x110] sm:$0xff]
        %v430 = vld [vmem:[%s4 + $0x118] sm:$0xff]
        %v431 = vld [vmem:[%s4 + $0x120] sm:$0xff]
        %v432 = vld [vmem:[%s4 + $0x128] sm:$0xff]
        %v433 = vld [vmem:[%s4 + $0x130] sm:$0xff]
        %v434 = vld [vmem:[%s4 + $0x138] sm:$0xff]
        %v435 = vld [vmem:[%s4 + $0x140] sm:$0xff]
        %v436 = vld [vmem:[%s4 + $0x148] sm:$0xff]
        %v437 = vld [vmem:[%s4 + $0x150] sm:$0xff]
        %v438 = vld [vmem:[%s4 + $0x158] sm:$0xff]
        %v439 = vld [vmem:[%s4 + $0x160] sm:$0xff]
        %v440 = vld [vmem:[%s4 + $0x168] sm:$0xff]
        %v441 = vld [vmem:[%s4 + $0x170] sm:$0xff]
        %v442 = vld [vmem:[%s4 + $0x178] sm:$0xff]
        %v443 = vld [vmem:[%s4 + $0x180] sm:$0xff]
        %v444 = vld [vmem:[%s4 + $0x188] sm:$0xff]
        %v445 = vld [vmem:[%s4 + $0x190] sm:$0xff]
        %v446 = vld [vmem:[%s4 + $0x198] sm:$0xff]
        %v447 = vld [vmem:[%s4 + $0x1a0] sm:$0xff]
        %v448 = vld [vmem:[%s4 + $0x1a8] sm:$0xff]
        %v449 = vld [vmem:[%s4 + $0x1b0] sm:$0xff]
        %v450 = vld [vmem:[%s4 + $0x1b8] sm:$0xff]
        %v451 = vld [vmem:[%s4 + $0x1c0] sm:$0xff]
        %v452 = vld [vmem:[%s4 + $0x1c8] sm:$0xff]
        %v453 = vld [vmem:[%s4 + $0x1d0] sm:$0xff]
        %v454 = vld [vmem:[%s4 + $0x1d8] sm:$0xff]
        %v455 = vld [vmem:[%s4 + $0x1e0] sm:$0xff]
        %v456 = vld [vmem:[%s4 + $0x1e8] sm:$0xff]
        %v457 = vld [vmem:[%s4 + $0x1f0] sm:$0xff]
        %v458 = vld [vmem:[%s4 + $0x1f8] sm:$0xff]
        %459 = vmatpush.msra.mxu0 %v455
        %460 = vmatpush.msra.mxu0 %v451
        %461 = vmatpush.msra.mxu0 %v447
        %462 = vmatpush.msra.mxu0 %v443
        %463 = vmatpush.msra.mxu0 %v439
        %464 = vmatpush.msra.mxu0 %v435
        %465 = vmatpush.msra.mxu0 %v431
        %466 = vmatpush.msra.mxu0 %v427
        %467 = vmatpush.msra.mxu0 %v423
        %468 = vmatpush.msra.mxu0 %v419
        %469 = vmatpush.msra.mxu0 %v415
        %470 = vmatpush.msra.mxu0 %v411
        %471 = vmatpush.msra.mxu0 %v407
        %472 = vmatpush.msra.mxu0 %v403
        %473 = vmatpush.msra.mxu0 %v399
        %474 = vmatpush.msra.mxu0 %v395
        %475 = vmatmul.f32.gmra.mxu0 %v376
        %v476 = vpop.f32.mrf.mxu0
        %v477 = vadd.f32 0.0, %v476
        %478 = vdwg.mxu0
        %479 = vmatpush.msra.mxu0 %v456
        %480 = vmatpush.msra.mxu0 %v452
        %481 = vmatpush.msra.mxu0 %v448
        %482 = vmatpush.msra.mxu0 %v444
        %483 = vmatpush.msra.mxu0 %v440
        %484 = vmatpush.msra.mxu0 %v436
        %485 = vmatpush.msra.mxu0 %v432
        %486 = vmatpush.msra.mxu0 %v428
        %487 = vmatpush.msra.mxu0 %v424
        %488 = vmatpush.msra.mxu0 %v420
        %489 = vmatpush.msra.mxu0 %v416
        %490 = vmatpush.msra.mxu0 %v412
        %491 = vmatpush.msra.mxu0 %v408
        %492 = vmatpush.msra.mxu0 %v404
        %493 = vmatpush.msra.mxu0 %v400
        %494 = vmatpush.msra.mxu0 %v396
        %495 = vmatmul.f32.gmra.mxu0 %v376
        %v496 = vpop.f32.mrf.mxu0
        %v497 = vadd.f32 0.0, %v496
        %498 = vdwg.mxu0
        %499 = vmatpush.msra.mxu0 %v457
        %500 = vmatpush.msra.mxu0 %v453
        %501 = vmatpush.msra.mxu0 %v449
        %502 = vmatpush.msra.mxu0 %v445
        %503 = vmatpush.msra.mxu0 %v441
        %504 = vmatpush.msra.mxu0 %v437
        %505 = vmatpush.msra.mxu0 %v433
        %506 = vmatpush.msra.mxu0 %v429
        %507 = vmatpush.msra.mxu0 %v425
        %508 = vmatpush.msra.mxu0 %v421
        %509 = vmatpush.msra.mxu0 %v417
        %510 = vmatpush.msra.mxu0 %v413
        %511 = vmatpush.msra.mxu0 %v409
        %512 = vmatpush.msra.mxu0 %v405
        %513 = vmatpush.msra.mxu0 %v401
        %514 = vmatpush.msra.mxu0 %v397
        %515 = vmatmul.f32.gmra.mxu0 %v376
        %v516 = vpop.f32.mrf.mxu0
        %v517 = vadd.f32 0.0, %v516
        %518 = vdwg.mxu0
        %519 = vmatpush.msra.mxu0 %v458
        %520 = vmatpush.msra.mxu0 %v454
        %521 = vmatpush.msra.mxu0 %v450
        %522 = vmatpush.msra.mxu0 %v446
        %523 = vmatpush.msra.mxu0 %v442
        %524 = vmatpush.msra.mxu0 %v438
        %525 = vmatpush.msra.mxu0 %v434
        %526 = vmatpush.msra.mxu0 %v430
        %527 = vmatpush.msra.mxu0 %v426
        %528 = vmatpush.msra.mxu0 %v422
        %529 = vmatpush.msra.mxu0 %v418
        %530 = vmatpush.msra.mxu0 %v414
        %531 = vmatpush.msra.mxu0 %v410
        %532 = vmatpush.msra.mxu0 %v406
        %533 = vmatpush.msra.mxu0 %v402
        %534 = vmatpush.msra.mxu0 %v398
        %535 = vmatmul.f32.gmra.mxu0 %v376
        %v536 = vpop.f32.mrf.mxu0
        %v537 = vadd.f32 0.0, %v536
        %538 = vdwg.mxu0
        %v539 = vmul.f32 %v477, %v477
        %v540 = vmul.f32 %v497, %v497
        %v541 = vmul.f32 %v517, %v517
        %v542 = vmul.f32 %v537, %v537
        %v543 = vld [vmem:[%s6] sm:$0xff]
        %v544 = vld [vmem:[%s6 + $0x8] sm:$0xff]
        %v545 = vld [vmem:[%s6 + $0x10] sm:$0xff]
        %v546 = vld [vmem:[%s6 + $0x18] sm:$0xff]
        %v547 = vld [vmem:[%s6 + $0x20] sm:$0xff]
        %v548 = vld [vmem:[%s6 + $0x28] sm:$0xff]
        %v549 = vld [vmem:[%s6 + $0x30] sm:$0xff]
        %v550 = vld [vmem:[%s6 + $0x38] sm:$0xff]
        %v551 = vld [vmem:[%s6 + $0x40] sm:$0xff]
        %v552 = vld [vmem:[%s6 + $0x48] sm:$0xff]
        %v553 = vld [vmem:[%s6 + $0x50] sm:$0xff]
        %v554 = vld [vmem:[%s6 + $0x58] sm:$0xff]
        %v555 = vld [vmem:[%s6 + $0x60] sm:$0xff]
        %v556 = vld [vmem:[%s6 + $0x68] sm:$0xff]
        %v557 = vld [vmem:[%s6 + $0x70] sm:$0xff]
        %v558 = vld [vmem:[%s6 + $0x78] sm:$0xff]
        %v559 = vld [vmem:[%s6 + $0x80] sm:$0xff]
        %v560 = vld [vmem:[%s6 + $0x88] sm:$0xff]
        %v561 = vld [vmem:[%s6 + $0x90] sm:$0xff]
        %v562 = vld [vmem:[%s6 + $0x98] sm:$0xff]
        %v563 = vld [vmem:[%s6 + $0xa0] sm:$0xff]
        %v564 = vld [vmem:[%s6 + $0xa8] sm:$0xff]
        %v565 = vld [vmem:[%s6 + $0xb0] sm:$0xff]
        %v566 = vld [vmem:[%s6 + $0xb8] sm:$0xff]
        %v567 = vld [vmem:[%s6 + $0xc0] sm:$0xff]
        %v568 = vld [vmem:[%s6 + $0xc8] sm:$0xff]
        %v569 = vld [vmem:[%s6 + $0xd0] sm:$0xff]
        %v570 = vld [vmem:[%s6 + $0xd8] sm:$0xff]
        %v571 = vld [vmem:[%s6 + $0xe0] sm:$0xff]
        %v572 = vld [vmem:[%s6 + $0xe8] sm:$0xff]
        %v573 = vld [vmem:[%s6 + $0xf0] sm:$0xff]
        %v574 = vld [vmem:[%s6 + $0xf8] sm:$0xff]
        %v575 = vld [vmem:[%s6 + $0x100] sm:$0xff]
        %v576 = vld [vmem:[%s6 + $0x108] sm:$0xff]
        %v577 = vld [vmem:[%s6 + $0x110] sm:$0xff]
        %v578 = vld [vmem:[%s6 + $0x118] sm:$0xff]
        %v579 = vld [vmem:[%s6 + $0x120] sm:$0xff]
        %v580 = vld [vmem:[%s6 + $0x128] sm:$0xff]
        %v581 = vld [vmem:[%s6 + $0x130] sm:$0xff]
        %v582 = vld [vmem:[%s6 + $0x138] sm:$0xff]
        %v583 = vld [vmem:[%s6 + $0x140] sm:$0xff]
        %v584 = vld [vmem:[%s6 + $0x148] sm:$0xff]
        %v585 = vld [vmem:[%s6 + $0x150] sm:$0xff]
        %v586 = vld [vmem:[%s6 + $0x158] sm:$0xff]
        %v587 = vld [vmem:[%s6 + $0x160] sm:$0xff]
        %v588 = vld [vmem:[%s6 + $0x168] sm:$0xff]
        %v589 = vld [vmem:[%s6 + $0x170] sm:$0xff]
        %v590 = vld [vmem:[%s6 + $0x178] sm:$0xff]
        %v591 = vld [vmem:[%s6 + $0x180] sm:$0xff]
        %v592 = vld [vmem:[%s6 + $0x188] sm:$0xff]
        %v593 = vld [vmem:[%s6 + $0x190] sm:$0xff]
        %v594 = vld [vmem:[%s6 + $0x198] sm:$0xff]
        %v595 = vld [vmem:[%s6 + $0x1a0] sm:$0xff]
        %v596 = vld [vmem:[%s6 + $0x1a8] sm:$0xff]
        %v597 = vld [vmem:[%s6 + $0x1b0] sm:$0xff]
        %v598 = vld [vmem:[%s6 + $0x1b8] sm:$0xff]
        %v599 = vld [vmem:[%s6 + $0x1c0] sm:$0xff]
        %v600 = vld [vmem:[%s6 + $0x1c8] sm:$0xff]
        %v601 = vld [vmem:[%s6 + $0x1d0] sm:$0xff]
        %v602 = vld [vmem:[%s6 + $0x1d8] sm:$0xff]
        %v603 = vld [vmem:[%s6 + $0x1e0] sm:$0xff]
        %v604 = vld [vmem:[%s6 + $0x1e8] sm:$0xff]
        %v605 = vld [vmem:[%s6 + $0x1f0] sm:$0xff]
        %v606 = vld [vmem:[%s6 + $0x1f8] sm:$0xff]
        %607 = vmatpush.msra.mxu0 %v558
        %608 = vmatpush.msra.mxu0 %v557
        %609 = vmatpush.msra.mxu0 %v556
        %610 = vmatpush.msra.mxu0 %v555
        %611 = vmatpush.msra.mxu0 %v554
        %612 = vmatpush.msra.mxu0 %v553
        %613 = vmatpush.msra.mxu0 %v552
        %614 = vmatpush.msra.mxu0 %v551
        %615 = vmatpush.msra.mxu0 %v550
        %616 = vmatpush.msra.mxu0 %v549
        %617 = vmatpush.msra.mxu0 %v548
        %618 = vmatpush.msra.mxu0 %v547
        %619 = vmatpush.msra.mxu0 %v546
        %620 = vmatpush.msra.mxu0 %v545
        %621 = vmatpush.msra.mxu0 %v544
        %622 = vmatpush.msra.mxu0 %v543
        %623 = vmatmul.f32.gmra.mxu0 %v539
        %v624 = vpop.f32.mrf.mxu0
        %v625 = vadd.f32 0.0, %v624
        %626 = vdwg.mxu0
        %627 = vmatpush.msra.mxu0 %v574
        %628 = vmatpush.msra.mxu0 %v573
        %629 = vmatpush.msra.mxu0 %v572
        %630 = vmatpush.msra.mxu0 %v571
        %631 = vmatpush.msra.mxu0 %v570
        %632 = vmatpush.msra.mxu0 %v569
        %633 = vmatpush.msra.mxu0 %v568
        %634 = vmatpush.msra.mxu0 %v567
        %635 = vmatpush.msra.mxu0 %v566
        %636 = vmatpush.msra.mxu0 %v565
        %637 = vmatpush.msra.mxu0 %v564
        %638 = vmatpush.msra.mxu0 %v563
        %639 = vmatpush.msra.mxu0 %v562
        %640 = vmatpush.msra.mxu0 %v561
        %641 = vmatpush.msra.mxu0 %v560
        %642 = vmatpush.msra.mxu0 %v559
        %643 = vmatmul.f32.gmra.mxu0 %v540
        %v644 = vpop.f32.mrf.mxu0
        %v645 = vadd.f32 %v625, %v644
        %646 = vdwg.mxu0
        %647 = vmatpush.msra.mxu0 %v590
        %648 = vmatpush.msra.mxu0 %v589
        %649 = vmatpush.msra.mxu0 %v588
        %650 = vmatpush.msra.mxu0 %v587
        %651 = vmatpush.msra.mxu0 %v586
        %652 = vmatpush.msra.mxu0 %v585
        %653 = vmatpush.msra.mxu0 %v584
        %654 = vmatpush.msra.mxu0 %v583
        %655 = vmatpush.msra.mxu0 %v582
        %656 = vmatpush.msra.mxu0 %v581
        %657 = vmatpush.msra.mxu0 %v580
        %658 = vmatpush.msra.mxu0 %v579
        %659 = vmatpush.msra.mxu0 %v578
        %660 = vmatpush.msra.mxu0 %v577
        %661 = vmatpush.msra.mxu0 %v576
        %662 = vmatpush.msra.mxu0 %v575
        %663 = vmatmul.f32.gmra.mxu0 %v541
        %v664 = vpop.f32.mrf.mxu0
        %v665 = vadd.f32 %v645, %v664
        %666 = vdwg.mxu0
        %667 = vmatpush.msra.mxu0 %v606
        %668 = vmatpush.msra.mxu0 %v605
        %669 = vmatpush.msra.mxu0 %v604
        %670 = vmatpush.msra.mxu0 %v603
        %671 = vmatpush.msra.mxu0 %v602
        %672 = vmatpush.msra.mxu0 %v601
        %673 = vmatpush.msra.mxu0 %v600
        %674 = vmatpush.msra.mxu0 %v599
        %675 = vmatpush.msra.mxu0 %v598
        %676 = vmatpush.msra.mxu0 %v597
        %677 = vmatpush.msra.mxu0 %v596
        %678 = vmatpush.msra.mxu0 %v595
        %679 = vmatpush.msra.mxu0 %v594
        %680 = vmatpush.msra.mxu0 %v593
        %681 = vmatpush.msra.mxu0 %v592
        %682 = vmatpush.msra.mxu0 %v591
        %683 = vmatmul.f32.gmra.mxu0 %v542
        %v684 = vpop.f32.mrf.mxu0
        %v685 = vadd.f32 %v665, %v684
        %686 = vdwg.mxu0
        %687 = vmatpush.msra.mxu0 %v394
        %688 = vmatpush.msra.mxu0 %v393
        %689 = vmatpush.msra.mxu0 %v392
        %690 = vmatpush.msra.mxu0 %v391
        %691 = vmatpush.msra.mxu0 %v390
        %692 = vmatpush.msra.mxu0 %v389
        %693 = vmatpush.msra.mxu0 %v388
        %694 = vmatpush.msra.mxu0 %v387
        %695 = vmatpush.msra.mxu0 %v386
        %696 = vmatpush.msra.mxu0 %v385
        %697 = vmatpush.msra.mxu0 %v384
        %698 = vmatpush.msra.mxu0 %v383
        %699 = vmatpush.msra.mxu0 %v382
        %700 = vmatpush.msra.mxu0 %v381
        %701 = vmatpush.msra.mxu0 %v380
        %702 = vmatpush.msra.mxu0 %v379
        %703 = vmatmul.f32.gmra.mxu0 %v378
        %v704 = vpop.f32.mrf.mxu0
        %v705 = vadd.f32 %v685, %v704
        %706 = vdwg.mxu0
        %vm707 = vcmask 130048
        %708 = vst.msk [vmem:[%s308] sm:$0xff] %vm707, %v705
        %s709 = sand.u32 %s189, 1
        %s710 = scalar_lea.sflag [#allocation4], %s709
        %s711 = sand.u32 %s189, 1
        %s712 = smul.addr %s711, 8
        %s713 = scalar_lea.vmem [#allocation5], %s712
        // Predicated region
        $region53: #{tpu_custom_call.1} parent=47 // pred_check
          %p714 = pneg %p199
        $region54: #{tpu_custom_call.1} parent=47 // pred_check_branch
          %716 = sbr.rel (%p714) target = $region56
        $region55: #{tpu_custom_call.1} parent=47 // pred_region
          %718 = vsyncadd %s710, 0
          %s719 = smul.addr %s24, 8
          %s720 = scalar_lea.hbm %s7, %s719
          %s722 = sshll.u32 %s713, 4
          %s723 = int_to_ptr.vmem [resolvable:$true] %s722
          %s724 = sshll.u32 %s720, 4
          %s725 = int_to_ptr.hbm [resolvable:$true] %s724
          %727 = dma.vmem_to_hbm [thread:$0]  %s723, 128, %s725, %s710
        $region56: #{tpu_custom_call.1} parent=47 // pred_fallthru
          _
      $region48: #{tpu_custom_call.1} parent=5 // pred_fallthru
        _
      %p728 = scmp.le.s32.totalorder 2, %s19
      // Predicated region
      $region57: #{tpu_custom_call.1} parent=5 // pred_check
        %p729 = pneg %p728
      $region58: #{tpu_custom_call.1} parent=5 // pred_check_branch
        %731 = sbr.rel (%p729) target = $region60
      $region59: #{tpu_custom_call.1} parent=5 // pred_region
        %s732 = ssub.s32 %s19, 2
        // Predicated region
        $region61: #{tpu_custom_call.1} parent=59 // pred_check
          %p733 = pneg %p205
        $region62: #{tpu_custom_call.1} parent=59 // pred_check_branch
          %735 = sbr.rel (%p733) target = $region64
        $region63: #{tpu_custom_call.1} parent=59 // pred_region
          %s736 = sand.u32 %s190, 1
          %s737 = scalar_lea.sflag [#allocation4], %s736
          %s738 = sand.u32 %s190, 1
          %s739 = smul.addr %s738, 8
          %s740 = scalar_lea.vmem [#allocation5], %s739
          %742 = dma.done %s737, 128
        $region64: #{tpu_custom_call.1} parent=59 // pred_fallthru
          _
      $region60: #{tpu_custom_call.1} parent=5 // pred_fallthru
        _
    $region6: #{tpu_custom_call.1} parent=1 // loop_footer
      %s23 = sadd.s32 1, %s19
    $region7: #{tpu_custom_call.1} parent=1 // loop_footer_branch
      %18 = sbr.rel target = $region3
    $region8: #{tpu_custom_call.1} parent=1 // loop_exit
      _
    %743 = vsyncpa [#allocation3], 1
    %s744 = scalar_lea.sflag [#allocation3], 1
    %745 = vsyncpa %s744, 1
    %746 = vsyncpa [#allocation4], 1
    %s747 = scalar_lea.sflag [#allocation4], 1
    %748 = vsyncpa %s747, 1

</llo_original>
